<compile_context>
chip_gen: v6e
topology: v6e:2x2x1
jax: 0.10.0
libtpu: 0.0.40
codegen_flags: <defaults>
</compile_context>

<pallas_src>
import jax
import jax.numpy as jnp
from jax.experimental import pallas as pl
from jax.experimental.pallas import tpu as pltpu


def _round_up(x, m):
    return ((x + m - 1) // m) * m


def patch_embed_kernel(x_ref, w_ref, b_ref, o_ref):
    # x_ref: (tm, K) bf16, w_ref: (K, tn) bf16, b_ref: (1, tn) f32, o_ref: (tm, tn)
    acc = jnp.dot(x_ref[...], w_ref[...], preferred_element_type=jnp.float32)
    o_ref[...] = (acc + b_ref[...]).astype(o_ref.dtype)
    # TODO(synk): norm_layer defaults to None -> nn.Identity, so no norm is applied here.


def patch_embed(x, weight, bias, *, tm=256, tn=512, compute_dtype=jnp.bfloat16):
    """PatchEmbed forward: (B, L, in_dim) -> (B, L, embed_dim).

    x: (B, L, in_dim); weight: (in_dim, embed_dim) (== PyTorch W.T); bias: (embed_dim,).
    """
    B, L, K = x.shape
    N = weight.shape[1]
    M = B * L
    out_dtype = x.dtype

    # ---- tile sizes / padded extents -------------------------------------
    tm = max(8, (tm // 8) * 8)          # rows: sublane multiple
    tn = max(128, (tn // 128) * 128)    # cols: lane multiple

    tm_eff = min(tm, _round_up(M, 8))
    M_pad = _round_up(M, tm_eff)

    N_pad = _round_up(N, 128)
    tn_eff = 128
    for cand in range(min(tn, N_pad), 0, -128):   # largest 128-multiple tile dividing N_pad
        if N_pad % cand == 0:
            tn_eff = cand
            break

    grid_m = M_pad // tm_eff
    grid_n = N_pad // tn_eff

    # ---- operands: cast to bf16 for the MXU, pad to lane/sublane-dense shapes ----
    x2d = x.reshape(M, K).astype(compute_dtype)
    w = weight.astype(compute_dtype)
    b2d = bias.astype(jnp.float32).reshape(1, N)

    if M_pad != M:
        x2d = jnp.pad(x2d, ((0, M_pad - M), (0, 0)))
    if N_pad != N:
        w = jnp.pad(w, ((0, 0), (0, N_pad - N)))
        b2d = jnp.pad(b2d, ((0, 0), (0, N_pad - N)))

    # Weight / bias are grid-constant when there is a single N tile: single-buffer them
    # (double-buffering a never-changing block only wastes VMEM).
    wb_mode = pl.Buffered(1) if grid_n == 1 else None

    in_bytes = jnp.dtype(compute_dtype).itemsize
    out_bytes = jnp.dtype(out_dtype).itemsize
    cost = pl.CostEstimate(
        flops=2 * M_pad * K * N_pad,
        transcendentals=0,
        bytes_accessed=(M_pad * K * in_bytes + K * N_pad * in_bytes
                        + N_pad * 4 + M_pad * N_pad * out_bytes),
    )

    out2d = pl.pallas_call(
        patch_embed_kernel,
        out_shape=jax.ShapeDtypeStruct((M_pad, N_pad), out_dtype),
        grid_spec=pltpu.PrefetchScalarGridSpec(
            num_scalar_prefetch=0,
            grid=(grid_m, grid_n),   # N innermost: each x row-tile is fetched once
            in_specs=[
                pl.BlockSpec((tm_eff, K), lambda i, j: (i, 0)),
                pl.BlockSpec((K, tn_eff), lambda i, j: (0, j), pipeline_mode=wb_mode),
                pl.BlockSpec((1, tn_eff), lambda i, j: (0, j), pipeline_mode=wb_mode),
            ],
            out_specs=pl.BlockSpec((tm_eff, tn_eff), lambda i, j: (i, j)),
        ),
        compiler_params=pltpu.CompilerParams(
            dimension_semantics=("parallel", "parallel"),
        ),
        cost_estimate=cost,
    )(x2d, w, b2d)

    return out2d[:M, :N].reshape(B, L, N)


if __name__ == "__main__":
    # Small shapes consistent with the module's (B, L, in_dim) -> (B, L, embed_dim) forward.
    B, L, in_dim, embed_dim = 2, 8, 32, 64

    key = jax.random.PRNGKey(0)
    kx, kw, kb = jax.random.split(key, 3)

    x = jax.random.normal(kx, (B, L, in_dim), dtype=jnp.float32)
    # nn.Linear(in_dim, embed_dim) parameters, weight stored transposed: (in_dim, embed_dim).
    weight = jax.random.normal(kw, (in_dim, embed_dim), dtype=jnp.float32) * 0.02
    bias = jax.random.normal(kb, (embed_dim,), dtype=jnp.float32) * 0.02

    out = jax.block_until_ready(patch_embed(x, weight, bias))
    assert out.shape == (B, L, embed_dim)

    # Reference with identical bf16 matmul inputs / f32 accumulation (matches kernel math).
    ref_bf16 = (jnp.dot(x.reshape(-1, in_dim).astype(jnp.bfloat16),
                        weight.astype(jnp.bfloat16),
                        preferred_element_type=jnp.float32)
                + bias).reshape(B, L, embed_dim).astype(x.dtype)
    assert jnp.allclose(out, ref_bf16, atol=1e-3, rtol=1e-3)

    # Loose sanity check against full-f32 nn.Linear semantics (bf16 cast error only).
    ref_f32 = x @ weight + bias
    assert jnp.allclose(out, ref_f32, atol=5e-2, rtol=5e-2)

    print("KERNEL_OK")
</pallas_src>

<mosaic_0001>
module attributes {stable_mosaic.version = 11 : i64} {
  func.func @patch_embed_kernel(%arg0: i32, %arg1: i32, %arg2: memref<16x32xbf16, #tpu.memory_space<vmem>>, %arg3: memref<32x128xbf16, #tpu.memory_space<vmem>>, %arg4: memref<1x128xf32, #tpu.memory_space<vmem>>, %arg5: memref<16x128xf32, #tpu.memory_space<vmem>>) attributes {dimension_semantics = [#tpu.dimension_semantics<parallel>, #tpu.dimension_semantics<parallel>], iteration_bounds = array<i64: 1, 1>, scalar_prefetch = 0 : i64, scratch_operands = 0 : i64, tpu.core_type = #tpu.core_type<tc>, window_params = [{transform_indices = @transform_0, window_bounds = array<i64: 16, 32>}, {pipeline_mode = #tpu.pipeline_mode<synchronous>, transform_indices = @transform_1, window_bounds = array<i64: 32, 128>}, {pipeline_mode = #tpu.pipeline_mode<synchronous>, transform_indices = @transform_2, window_bounds = array<i64: 1, 128>}, {transform_indices = @transform_3, window_bounds = array<i64: 16, 128>}]} {
    %c0 = arith.constant 0 : index
    %c0_0 = arith.constant 0 : index
    %0 = vector.load %arg2[%c0, %c0_0] : memref<16x32xbf16, #tpu.memory_space<vmem>>, vector<16x32xbf16>
    %c0_1 = arith.constant 0 : index
    %c0_2 = arith.constant 0 : index
    %1 = vector.load %arg3[%c0_1, %c0_2] : memref<32x128xbf16, #tpu.memory_space<vmem>>, vector<32x128xbf16>
    %cst = arith.constant dense<0.000000e+00> : vector<16x128xf32>
    %2 = tpu.matmul %0, %1, %cst {dimension_numbers = #tpu.dot_dimension_numbers<[1], [0], [0], [1], [0, 0, 1, 1], [], []>} : vector<16x32xbf16>, vector<32x128xbf16>, vector<16x128xf32> -> vector<16x128xf32>
    %c0_3 = arith.constant 0 : index
    %c0_4 = arith.constant 0 : index
    %3 = vector.load %arg4[%c0_3, %c0_4] : memref<1x128xf32, #tpu.memory_space<vmem>>, vector<1x128xf32>
    %4 = vector.broadcast %3 : vector<1x128xf32> to vector<16x128xf32>
    %5 = arith.addf %2, %4 : vector<16x128xf32>
    %c0_5 = arith.constant 0 : index
    %c0_6 = arith.constant 0 : index
    %6 = vector.load %arg5[%c0_5, %c0_6] : memref<16x128xf32, #tpu.memory_space<vmem>>, vector<16x128xf32>
    tpu.vector_store %arg5[%c0_5, %c0_6], %5 {strides = array<i32>} : memref<16x128xf32, #tpu.memory_space<vmem>>, vector<16x128xf32>,
    return
  }
  func.func @transform_0(%arg0: i32, %arg1: i32) -> (i32, i32) {
    %c0_i32 = arith.constant 0 : i32
    %c0_i32_0 = arith.constant 0 : i32
    return %arg0, %c0_i32 : i32, i32
  }
  func.func @transform_1(%arg0: i32, %arg1: i32) -> (i32, i32) {
    %c0_i32 = arith.constant 0 : i32
    %c0_i32_0 = arith.constant 0 : i32
    return %c0_i32, %arg1 : i32, i32
  }
  func.func @transform_2(%arg0: i32, %arg1: i32) -> (i32, i32) {
    %c0_i32 = arith.constant 0 : i32
    %c0_i32_0 = arith.constant 0 : i32
    return %c0_i32, %arg1 : i32, i32
  }
  func.func @transform_3(%arg0: i32, %arg1: i32) -> (i32, i32) {
    %c0_i32 = arith.constant 0 : i32
    return %arg0, %arg1 : i32, i32
  }
}

</mosaic_0001>

<llo_original>
// kernel: tpu_custom_call.1
$region0: #{tpu_custom_call.1}
  #allocation0 [shape = 'u32[]', space=smem, size = 0x4, offset = 0x4, fixed_abs, tag = 'smem constant byte address 0x4 - core index']
  #allocation1 [shape = 'u32[144,128]{1,0:T(1,128)}', space=vmem, size = 0x12000, scoped, tag = 'internal scratch']
  %s0 = inlined_call_operand.hbm [shape: bf16[16,32], index: 0, kind: input, shape index: {}]
  %s1 = inlined_call_operand.hbm [shape: bf16[32,128], index: 1, kind: input, shape index: {}]
  %s2 = inlined_call_operand.vmem [shape: f32[1,128], index: 2, kind: input, shape index: {}]
  %s3 = inlined_call_operand.hbm [shape: f32[16,128], index: 3, kind: output, shape index: {}]
  %s4 = sld [smem:[#allocation0]]
  $region30: #{tpu_custom_call.1} parent=0
    _
  %s6 = ssub.s32 1, %s4
  %s7 = scalar_select 0, %s6, %s4
  $region1: #{tpu_custom_call.1} parent=0
    #allocation2 [shape = 'u8[4096]{0}', space=vmem, size = 0x1000, scoped, tag = 'input window, operand 0, single buffered']
    #allocation3 [shape = 's32[1]{0}', space=sflag, size = 0x4, scoped, tag = 'scoped memory for tpu_custom_call.1']
    #allocation4 [shape = 's32[1]{0}', space=sflag, size = 0x4, scoped, tag = 'scoped memory for tpu_custom_call.1']
    #allocation5 [shape = 'u8[8192]{0}', space=vmem, size = 0x2000, scoped, tag = 'input window, operand 1, single buffered']
    #allocation6 [shape = 's32[1]{0}', space=sflag, size = 0x4, scoped, tag = 'scoped memory for tpu_custom_call.1']
    #allocation7 [shape = 'u8[8192]{0}', space=vmem, size = 0x2000, scoped, tag = 'output window, operand 0, single buffered']
    %8 = vsyncpa [#allocation3], 0
    %9 = vsyncpa [#allocation6], 0
    %10 = vsyncpa [#allocation4], 0
    // Predicated region
    $region2: #{tpu_custom_call.1} parent=1 // pred_check
      _
    $region3: #{tpu_custom_call.1} parent=1 // pred_check_branch
      %12 = sbr.rel (0) target = $region5
    $region4: #{tpu_custom_call.1} parent=1 // pred_region
      %s14 = ssub.s32 128, 128
      %15 = vsyncadd [#allocation3], %s14
      %s16 = sshll.u32 [#allocation2], 4
      %s17 = int_to_ptr.vmem [resolvable:$true] %s16
      %22 = dma.hbm_to_vmem [thread:$0]  %s0, 128, %s17, [#allocation3], 64, 64, 4
    $region5: #{tpu_custom_call.1} parent=1 // pred_fallthru
      _
    // Predicated region
    $region6: #{tpu_custom_call.1} parent=1 // pred_check
      _
    $region7: #{tpu_custom_call.1} parent=1 // pred_check_branch
      %24 = sbr.rel (0) target = $region9
    $region8: #{tpu_custom_call.1} parent=1 // pred_region
      %s26 = ssub.s32 256, 256
      %27 = vsyncadd [#allocation6], %s26
      %s28 = sshll.u32 [#allocation5], 4
      %s29 = int_to_ptr.vmem [resolvable:$true] %s28
      %34 = dma.hbm_to_vmem [thread:$0]  %s1, 256, %s29, [#allocation6], 64, 64, 4
    $region9: #{tpu_custom_call.1} parent=1 // pred_fallthru
      _
    // Predicated region
    $region10: #{tpu_custom_call.1} parent=1 // pred_check
      _
    $region11: #{tpu_custom_call.1} parent=1 // pred_check_branch
      %36 = sbr.rel (0) target = $region13
    $region12: #{tpu_custom_call.1} parent=1 // pred_region
      _
    $region13: #{tpu_custom_call.1} parent=1 // pred_fallthru
      _
    // Predicated region
    $region14: #{tpu_custom_call.1} parent=1 // pred_check
      _
    $region15: #{tpu_custom_call.1} parent=1 // pred_check_branch
      %38 = sbr.rel (0) target = $region17
    $region16: #{tpu_custom_call.1} parent=1 // pred_region
      %39 = dma.done [#allocation3], 128
    $region17: #{tpu_custom_call.1} parent=1 // pred_fallthru
      _
    // Predicated region
    $region18: #{tpu_custom_call.1} parent=1 // pred_check
      _
    $region19: #{tpu_custom_call.1} parent=1 // pred_check_branch
      %41 = sbr.rel (0) target = $region21
    $region20: #{tpu_custom_call.1} parent=1 // pred_region
      %42 = dma.done [#allocation6], 256
    $region21: #{tpu_custom_call.1} parent=1 // pred_fallthru
      _
    %v44 = vld [vmem:[#allocation2] sm:$0xf]
    %v45 = vld [vmem:[#allocation2 + $0x4] sm:$0xf]
    %v46 = vld [vmem:[#allocation5] sm:$0xf]
    %v47 = vld [vmem:[#allocation5 + $0x4] sm:$0xf]
    %v48 = vld [vmem:[#allocation5 + $0x8] sm:$0xf]
    %v49 = vld [vmem:[#allocation5 + $0xc] sm:$0xf]
    %v50 = vld [vmem:[%s2] sm:$0x1]
    %v52 = vlaneseq
    %v53 = vshrl.u32 %v52, 7
    %v54 = vsub.s32 0, %v53
    %v55 = vrot.slane %v50, %v54
    %v59 = vunpack.c.l.b16 %v44
    %v60 = vunpack.c.l.b16 %v45
    %v61 = vpack.c.b16 %v60, %v59
    %v66 = vunpack.c.l.b16 %v46
    %v67 = vunpack.c.l.b16 %v47
    %v68 = vunpack.c.l.b16 %v48
    %v69 = vunpack.c.l.b16 %v49
    %v70 = vpack.c.b16 %v67, %v66
    %v71 = vpack.c.b16 %v69, %v68
    %vm74 = vcmask 261120
    %v76 = vsel %vm74, %v61, 0
    %78 = vmatprep.subr.bf16.mxu0 0
    %79 = vmatpush1.bf16.msra.mxu0 0
    %80 = vmatprep.subr.bf16.mxu0 0
    %81 = vmatpush1.bf16.msra.mxu0 0
    %82 = vmatprep.subr.bf16.mxu0 0
    %83 = vmatpush1.bf16.msra.mxu0 0
    %84 = vmatprep.subr.bf16.mxu0 0
    %85 = vmatpush1.bf16.msra.mxu0 0
    %86 = vmatprep.subr.bf16.mxu0 0
    %87 = vmatpush1.bf16.msra.mxu0 0
    %88 = vmatprep.subr.bf16.mxu0 0
    %89 = vmatpush1.bf16.msra.mxu0 0
    %90 = vmatprep.subr.bf16.mxu0 0
    %91 = vmatpush1.bf16.msra.mxu0 %v71
    %92 = vmatprep.subr.bf16.mxu0 0
    %93 = vmatpush1.bf16.msra.mxu0 %v70
    %94 = vmatprep.subr.bf16.mxu0 0
    %95 = vmatpush2.bf16.msra.mxu0 0
    %96 = vmatprep.subr.bf16.mxu0 0
    %97 = vmatpush2.bf16.msra.mxu0 0
    %98 = vmatprep.subr.bf16.mxu0 0
    %99 = vmatpush2.bf16.msra.mxu0 0
    %100 = vmatprep.subr.bf16.mxu0 0
    %101 = vmatpush2.bf16.msra.mxu0 0
    %102 = vmatprep.subr.bf16.mxu0 0
    %103 = vmatpush2.bf16.msra.mxu0 0
    %104 = vmatprep.subr.bf16.mxu0 0
    %105 = vmatpush2.bf16.msra.mxu0 0
    %106 = vmatprep.subr.bf16.mxu0 0
    %107 = vmatpush2.bf16.msra.mxu0 0
    %108 = vmatprep.subr.bf16.mxu0 0
    %109 = vmatpush2.bf16.msra.mxu0 0
    %110 = vmatprep.mubr.bf16.mxu0 0
    %111 = vmatmul.mubr.bf16.gmra.mxu0 %v76
    %v112 = vpop.f32.mrf.mxu0
    %v113 = vadd.f32 %v55, %v112
    %v114 = vpop.f32.mrf.mxu0
    %v115 = vpop.f32.mrf.mxu0
    %v116 = vadd.f32 %v55, %v115
    %v117 = vpop.f32.mrf.mxu0
    %118 = vdwg.mxu0
    %119 = vst [vmem:[#allocation7] sm:$0xff] %v113
    %120 = vst [vmem:[#allocation7 + $0x8] sm:$0xff] %v116
    // Predicated region
    $region22: #{tpu_custom_call.1} parent=1 // pred_check
      _
    $region23: #{tpu_custom_call.1} parent=1 // pred_check_branch
      %122 = sbr.rel (0) target = $region25
    $region24: #{tpu_custom_call.1} parent=1 // pred_region
      %s124 = ssub.s32 256, 256
      %125 = vsyncadd [#allocation4], %s124
      %s126 = sshll.u32 [#allocation7], 4
      %s127 = int_to_ptr.vmem [resolvable:$true] %s126
      %132 = dma.vmem_to_hbm [thread:$0]  %s127, 256, %s3, [#allocation4], 128, 128, 8
    $region25: #{tpu_custom_call.1} parent=1 // pred_fallthru
      _
    // Predicated region
    $region26: #{tpu_custom_call.1} parent=1 // pred_check
      _
    $region27: #{tpu_custom_call.1} parent=1 // pred_check_branch
      %134 = sbr.rel (0) target = $region29
    $region28: #{tpu_custom_call.1} parent=1 // pred_region
      %135 = dma.done [#allocation4], 256
    $region29: #{tpu_custom_call.1} parent=1 // pred_fallthru
      _
    %136 = vsyncpa [#allocation3], 1
    %137 = vsyncpa [#allocation6], 1
    %138 = vsyncpa [#allocation4], 1

</llo_original>
